<compile_context>
chip_gen: v7x
topology: tpu7x:2x2x1
jax: 0.10.0
libtpu: 0.0.40
codegen_flags: <defaults>
</compile_context>

<pallas_src>
import jax
import jax.numpy as jnp
import numpy as np
from jax.experimental import pallas as pl
from jax.experimental.pallas import tpu as pltpu


def _round_up(x, m):
    return ((x + m - 1) // m) * m


def _chip_vmem_bytes():
    """Physical VMEM per TensorCore, with a conservative fallback."""
    try:
        return int(pltpu.get_tpu_info().vmem_capacity_bytes)
    except Exception:
        return 64 * 1024 * 1024  # v7x-sized fallback (safe everywhere)


def _attention_kernel(x_ref, w_ref, len_ref, rep_ref, att_ref):
    """One grid step = one block of bblk batch rows.

    x_ref   : VMEM (bblk, T, H)  input dtype -- inputs block
    w_ref   : VMEM (1, H)                    -- attention weight vector
    len_ref : VMEM (bblk, 1) i32             -- sequence lengths for this block
    rep_ref : VMEM (bblk, H)                 -- output representations
    att_ref : VMEM (bblk, T)                 -- output (re-normalized) attentions
    """
    x = x_ref[...].astype(jnp.float32)             # (bblk, T, H)  up-cast in-kernel
    w = w_ref[...].astype(jnp.float32)             # (1, H)
    lens = len_ref[...]                            # (bblk, 1) int32

    # Scores kept in x's native layout (T on sublanes, singleton lane dim):
    # lane-reduce over H -> (bblk, T, 1).  No lane<->sublane relayout needed
    # for the rest of the softmax chain or for the weighted sum against x.
    s = jnp.sum(x * w[None, :, :], axis=-1, keepdims=True)   # (bblk, T, 1)
    s = jnp.maximum(s, 0.0)                                   # relu
    s = s - jnp.max(s, axis=1, keepdims=True)                 # stable exp
    e = jnp.exp(s)                                            # (bblk, T, 1)

    # Length mask applied to the exponentials; the first softmax denominator
    # cancels, so one normalization is algebraically identical to
    # softmax -> mask -> renormalize.
    idx = jax.lax.broadcasted_iota(jnp.int32, e.shape, 1)     # (bblk, T, 1)
    e = jnp.where(idx < lens[:, :, None], e, 0.0)

    denom = jnp.sum(e, axis=1, keepdims=True)                 # (bblk, 1, 1)
    # approx=True would shift this fully onto the EUP but does not meet the
    # 1e-5 verification tolerance; keep the exact reciprocal (still cheap).
    att = e * pl.reciprocal(denom, approx=False)              # (bblk, T, 1)

    # Weighted sum over the sequence axis, still in native layout -> (bblk, H).
    rep_ref[...] = jnp.sum(x * att, axis=1).astype(rep_ref.dtype)

    # Single relayout: (bblk, T, 1) -> lane-dense (bblk, T) for the store.
    att_ref[...] = jnp.squeeze(att, axis=-1).astype(att_ref.dtype)


@jax.jit
def attention_forward(inputs, att_weights, lengths):
    """inputs: (B, T, H) f32/bf16, att_weights: (1, H), lengths: (B,) int."""
    B, T, H = inputs.shape
    in_dtype = inputs.dtype
    itemsize_in = jnp.dtype(in_dtype).itemsize
    itemsize_out = itemsize_in

    # ---- lane/sublane-padded VMEM footprint model (per batch row) ----------
    lane_h = _round_up(H, 128)                       # minor dim padded to 128 lanes
    lane_t = _round_up(T, 128)
    sub_in = 8 * max(1, 4 // itemsize_in)            # sublane granularity (f32:8, bf16:16)
    x_row_in = _round_up(T, sub_in) * lane_h * itemsize_in    # x block, input dtype
    x_row_f32 = _round_up(T, 8) * lane_h * 4                  # f32 product temporaries
    s_row_f32 = _round_up(T, 8) * 128 * 4                     # (.,T,1) score-chain temps
    out_row = lane_t * itemsize_out + lane_h * itemsize_out + 128 * 4  # att+rep+lens blocks
    k_f32 = 1 if in_dtype == jnp.float32 else 2      # bf16 adds the in-kernel up-cast copy

    # per-row bytes: 2x double-buffered x, live f32 temporaries (product +
    # weighted-sum), ~2 live score-chain temps, 2x double-buffered outputs.
    per_row = 2 * x_row_in + k_f32 * x_row_f32 + 2 * s_row_f32 + 2 * out_row
    fixed = 2 * 8 * lane_h * 4 + (2 << 20)           # w block + internal-scratch slack

    # ---- per-chip targets ---------------------------------------------------
    vmem_cap = _chip_vmem_bytes()
    usable = (vmem_cap * 3) // 4                     # leave headroom below physical
    # v7x (64 MiB VMEM, 3.2 TB/s HBM): bigger blocks amortize per-step overhead.
    # v5e/v6e (128 MiB VMEM): ~8 MiB real blocks with an explicitly raised limit.
    target_x_bytes = (12 << 20) if vmem_cap <= (64 << 20) else (8 << 20)

    # ---- block size ---------------------------------------------------------
    bblk_target = max(8, (target_x_bytes // x_row_in) // 8 * 8)
    bblk_steps = max(8, _round_up(pl.cdiv(B, 4), 8))          # keep >= ~4 grid steps
    bblk_budget = max(8, ((usable - fixed) // per_row) // 8 * 8)
    bblk = max(8, min(bblk_target, bblk_steps, bblk_budget))
    if bblk >= B:
        bblk = B          # single exact block (no partial rows) for small batches
    # TODO(synk): if even an 8-row block exceeds the VMEM budget (very long T*H
    # rows), tile T with online-softmax accumulators instead of shrinking bblk.

    vmem_limit = int(min(usable, max(16 << 20, bblk * per_row + fixed)))
    grid = pl.cdiv(B, bblk)

    lens = lengths.astype(jnp.int32).reshape(B, 1)

    rep, att = pl.pallas_call(
        _attention_kernel,
        out_shape=(
            jax.ShapeDtypeStruct((B, H), in_dtype),
            jax.ShapeDtypeStruct((B, T), in_dtype),
        ),
        grid_spec=pl.GridSpec(
            grid=(grid,),
            in_specs=[
                pl.BlockSpec((bblk, T, H), lambda i: (i, 0, 0)),
                pl.BlockSpec((1, H), lambda i: (0, 0)),
                pl.BlockSpec((bblk, 1), lambda i: (i, 0)),
            ],
            out_specs=(
                pl.BlockSpec((bblk, H), lambda i: (i, 0)),
                pl.BlockSpec((bblk, T), lambda i: (i, 0)),
            ),
        ),
        compiler_params=pltpu.CompilerParams(
            dimension_semantics=("parallel",),
            vmem_limit_bytes=vmem_limit,
        ),
    )(inputs, att_weights, lens)

    return rep, att


def attention_reference(inputs, att_weights, lengths):
    """Plain-JAX mirror of the PyTorch forward, for verification."""
    B, T, H = inputs.shape
    scores = jnp.einsum("bth,h->bt", inputs, att_weights[0])
    att = jax.nn.softmax(jax.nn.relu(scores), axis=-1)
    mask = (jnp.arange(T)[None, :] < lengths[:, None]).astype(inputs.dtype)
    masked = att * mask
    att = masked / jnp.sum(masked, axis=-1, keepdims=True)
    rep = jnp.sum(inputs * att[..., None], axis=1)
    return rep, att


if __name__ == "__main__":
    B, T, H = 2, 8, 32

    key = jax.random.PRNGKey(0)
    k_x, k_w = jax.random.split(key)

    # deterministic param init, matching nn.init.uniform_(-stdv, stdv)
    stdv = 1.0 / np.sqrt(H)
    att_weights = jax.random.uniform(
        k_w, (1, H), dtype=jnp.float32, minval=-stdv, maxval=stdv)

    inputs = jax.random.normal(k_x, (B, T, H), dtype=jnp.float32)

    # lengths=None in the PyTorch module -> all-ones mask; also test real masking.
    lengths_none = jnp.full((B,), T, dtype=jnp.int32)
    lengths_real = jnp.array([T, T - 3], dtype=jnp.int32)

    for lengths in (lengths_none, lengths_real):
        rep, att = attention_forward(inputs, att_weights, lengths)
        rep, att = jax.block_until_ready((rep, att))
        rep_ref, att_ref = attention_reference(inputs, att_weights, lengths)
        np.testing.assert_allclose(np.asarray(rep), np.asarray(rep_ref),
                                   rtol=1e-5, atol=1e-5)
        np.testing.assert_allclose(np.asarray(att), np.asarray(att_ref),
                                   rtol=1e-5, atol=1e-5)

    print("KERNEL_OK")
</pallas_src>

<mosaic_0001>
module attributes {stable_mosaic.version = 11 : i64} {
  func.func @_attention_kernel(%arg0: i32, %arg1: memref<2x8x32xf32, #tpu.memory_space<vmem>>, %arg2: memref<1x32xf32, #tpu.memory_space<vmem>>, %arg3: memref<2x1xi32, #tpu.memory_space<vmem>>, %arg4: memref<2x32xf32, #tpu.memory_space<vmem>>, %arg5: memref<2x8xf32, #tpu.memory_space<vmem>>) attributes {dimension_semantics = [#tpu.dimension_semantics<parallel>], iteration_bounds = array<i64: 1>, scalar_prefetch = 0 : i64, scratch_operands = 0 : i64, tpu.core_type = #tpu.core_type<tc>, window_params = [{transform_indices = @transform_0, window_bounds = array<i64: 2, 8, 32>}, {pipeline_mode = #tpu.pipeline_mode<synchronous>, transform_indices = @transform_1, window_bounds = array<i64: 1, 32>}, {transform_indices = @transform_2, window_bounds = array<i64: 2, 1>}, {transform_indices = @transform_3, window_bounds = array<i64: 2, 32>}, {transform_indices = @transform_4, window_bounds = array<i64: 2, 8>}]} {
    %c0 = arith.constant 0 : index
    %c0_0 = arith.constant 0 : index
    %c0_1 = arith.constant 0 : index
    %0 = vector.load %arg1[%c0, %c0_0, %c0_1] : memref<2x8x32xf32, #tpu.memory_space<vmem>>, vector<2x8x32xf32>
    %c0_2 = arith.constant 0 : index
    %c0_3 = arith.constant 0 : index
    %1 = vector.load %arg2[%c0_2, %c0_3] : memref<1x32xf32, #tpu.memory_space<vmem>>, vector<1x32xf32>
    %c0_4 = arith.constant 0 : index
    %c0_5 = arith.constant 0 : index
    %2 = vector.load %arg3[%c0_4, %c0_5] : memref<2x1xi32, #tpu.memory_space<vmem>>, vector<2x1xi32>
    %3 = vector.shape_cast %1 : vector<1x32xf32> to vector<1x1x32xf32>
    %4 = vector.broadcast %3 : vector<1x1x32xf32> to vector<2x8x32xf32>
    %5 = arith.mulf %0, %4 : vector<2x8x32xf32>
    %cst = arith.constant dense<0.000000e+00> : vector<2x8xf32>
    %6 = vector.multi_reduction <add>, %5, %cst [2] : vector<2x8x32xf32> to vector<2x8xf32>
    %7 = vector.shape_cast %6 : vector<2x8xf32> to vector<2x8x1xf32>
    %cst_6 = arith.constant 0.000000e+00 : f32
    %8 = vector.broadcast %cst_6 : f32 to vector<2x8x1xf32>
    %9 = arith.maximumf %7, %8 : vector<2x8x1xf32>
    %cst_7 = arith.constant dense<0xFF800000> : vector<2x1xf32>
    %10 = vector.multi_reduction <maximumf>, %9, %cst_7 [1] : vector<2x8x1xf32> to vector<2x1xf32>
    %11 = vector.shape_cast %10 : vector<2x1xf32> to vector<2x1x1xf32>
    %12 = vector.broadcast %11 : vector<2x1x1xf32> to vector<2x8x1xf32>
    %13 = arith.subf %9, %12 : vector<2x8x1xf32>
    %14 = math.exp %13 : vector<2x8x1xf32>
    %15 = tpu.iota {dimensions = array<i32: 1>} : vector<2x8x1xi32>
    %16 = vector.shape_cast %2 : vector<2x1xi32> to vector<2x1x1xi32>
    %17 = vector.broadcast %16 : vector<2x1x1xi32> to vector<2x8x1xi32>
    %18 = arith.cmpi slt, %15, %17 : vector<2x8x1xi32>
    %cst_8 = arith.constant 0.000000e+00 : f32
    %19 = vector.broadcast %cst_8 : f32 to vector<2x8x1xf32>
    %20 = arith.select %18, %14, %19 : vector<2x8x1xi1>, vector<2x8x1xf32>
    %cst_9 = arith.constant dense<0.000000e+00> : vector<2x1xf32>
    %21 = vector.multi_reduction <add>, %20, %cst_9 [1] : vector<2x8x1xf32> to vector<2x1xf32>
    %22 = vector.shape_cast %21 : vector<2x1xf32> to vector<2x1x1xf32>
    %23 = tpu.reciprocal %22 : vector<2x1x1xf32> -> vector<2x1x1xf32>
    %24 = vector.broadcast %23 : vector<2x1x1xf32> to vector<2x8x1xf32>
    %25 = arith.mulf %20, %24 : vector<2x8x1xf32>
    %26 = vector.broadcast %25 : vector<2x8x1xf32> to vector<2x8x32xf32>
    %27 = arith.mulf %0, %26 : vector<2x8x32xf32>
    %cst_10 = arith.constant dense<0.000000e+00> : vector<2x32xf32>
    %28 = vector.multi_reduction <add>, %27, %cst_10 [1] : vector<2x8x32xf32> to vector<2x32xf32>
    %c0_11 = arith.constant 0 : index
    %c0_12 = arith.constant 0 : index
    %29 = vector.load %arg4[%c0_11, %c0_12] : memref<2x32xf32, #tpu.memory_space<vmem>>, vector<2x32xf32>
    tpu.vector_store %arg4[%c0_11, %c0_12], %28 {strides = array<i32>} : memref<2x32xf32, #tpu.memory_space<vmem>>, vector<2x32xf32>,
    %30 = vector.shape_cast %25 : vector<2x8x1xf32> to vector<2x8xf32>
    %c0_13 = arith.constant 0 : index
    %c0_14 = arith.constant 0 : index
    %31 = vector.load %arg5[%c0_13, %c0_14] : memref<2x8xf32, #tpu.memory_space<vmem>>, vector<2x8xf32>
    tpu.vector_store %arg5[%c0_13, %c0_14], %30 {strides = array<i32>} : memref<2x8xf32, #tpu.memory_space<vmem>>, vector<2x8xf32>,
    return
  }
  func.func @transform_0(%arg0: i32) -> (i32, i32, i32) {
    %c0_i32 = arith.constant 0 : i32
    %c0_i32_0 = arith.constant 0 : i32
    %c0_i32_1 = arith.constant 0 : i32
    return %arg0, %c0_i32, %c0_i32_0 : i32, i32, i32
  }
  func.func @transform_1(%arg0: i32) -> (i32, i32) {
    %c0_i32 = arith.constant 0 : i32
    %c0_i32_0 = arith.constant 0 : i32
    %c0_i32_1 = arith.constant 0 : i32
    return %c0_i32, %c0_i32_0 : i32, i32
  }
  func.func @transform_2(%arg0: i32) -> (i32, i32) {
    %c0_i32 = arith.constant 0 : i32
    %c0_i32_0 = arith.constant 0 : i32
    return %arg0, %c0_i32 : i32, i32
  }
  func.func @transform_3(%arg0: i32) -> (i32, i32) {
    %c0_i32 = arith.constant 0 : i32
    %c0_i32_0 = arith.constant 0 : i32
    return %arg0, %c0_i32 : i32, i32
  }
  func.func @transform_4(%arg0: i32) -> (i32, i32) {
    %c0_i32 = arith.constant 0 : i32
    %c0_i32_0 = arith.constant 0 : i32
    return %arg0, %c0_i32 : i32, i32
  }
}

</mosaic_0001>

<llo_original>
// kernel: attention_forward.1
$region0: #{attention_forward.1}
  #allocation0 [shape = 'u32[]', space=smem, size = 0x4, offset = 0x4, fixed_abs, tag = 'smem constant byte address 0x4 - core index']
  #allocation1 [shape = 'u32[144,128]{1,0:T(1,128)}', space=vmem, size = 0x12000, scoped, tag = 'internal scratch']
  %s0 = inlined_call_operand.hbm [shape: f32[2,8,32], index: 0, kind: input, shape index: {}]
  %s1 = inlined_call_operand.vmem [shape: f32[1,32], index: 1, kind: input, shape index: {}]
  %s2 = inlined_call_operand.vmem [shape: s32[2,1], index: 2, kind: input, shape index: {}]
  %s3 = inlined_call_operand.hbm [shape: f32[2,32], index: 3, kind: output, shape index: {0}]
  %s4 = inlined_call_operand.hbm [shape: f32[2,8], index: 4, kind: output, shape index: {1}]
  %5 = xla_tuple %s3, %s4
  %s6 = sld [smem:[#allocation0]]
  $region34: #{attention_forward.1} parent=0
    _
  %s8 = ssub.s32 1, %s6
  %s9 = scalar_select 0, %s8, %s6
  $region1: #{attention_forward.1} parent=0
    #allocation2 [shape = 'u8[8192]{0}', space=vmem, size = 0x2000, scoped, tag = 'input window, operand 0, single buffered']
    #allocation3 [shape = 's32[1]{0}', space=sflag, size = 0x4, scoped, tag = 'scoped memory for attention_forward.1']
    #allocation4 [shape = 's32[1]{0}', space=sflag, size = 0x4, scoped, tag = 'scoped memory for attention_forward.1']
    #allocation5 [shape = 'u8[1024]{0}', space=vmem, size = 0x400, scoped, tag = 'output window, operand 0, single buffered']
    #allocation6 [shape = 'u8[1024]{0}', space=vmem, size = 0x400, scoped, tag = 'output window, operand 1, single buffered']
    #allocation7 [shape = 's32[1]{0}', space=sflag, size = 0x4, scoped, tag = 'scoped memory for attention_forward.1']
    %10 = vsyncpa [#allocation3], 0
    %11 = vsyncpa [#allocation4], 0
    %12 = vsyncpa [#allocation7], 0
    // Predicated region
    $region2: #{attention_forward.1} parent=1 // pred_check
      _
    $region3: #{attention_forward.1} parent=1 // pred_check_branch
      %14 = sbr.rel (0) target = $region5
    $region4: #{attention_forward.1} parent=1 // pred_region
      %s16 = ssub.s32 256, 256
      %17 = vsyncadd [#allocation3], %s16
      %s18 = sshll.u32 [#allocation2], 4
      %s19 = int_to_ptr.vmem [resolvable:$true] %s18
      %24 = dma.hbm_to_vmem [thread:$0]  %s0, 256, %s19, [#allocation3], 128, 128, 8
    $region5: #{attention_forward.1} parent=1 // pred_fallthru
      _
    // Predicated region
    $region6: #{attention_forward.1} parent=1 // pred_check
      _
    $region7: #{attention_forward.1} parent=1 // pred_check_branch
      %26 = sbr.rel (0) target = $region9
    $region8: #{attention_forward.1} parent=1 // pred_region
      _
    $region9: #{attention_forward.1} parent=1 // pred_fallthru
      _
    // Predicated region
    $region10: #{attention_forward.1} parent=1 // pred_check
      _
    $region11: #{attention_forward.1} parent=1 // pred_check_branch
      %28 = sbr.rel (0) target = $region13
    $region12: #{attention_forward.1} parent=1 // pred_region
      _
    $region13: #{attention_forward.1} parent=1 // pred_fallthru
      _
    // Predicated region
    $region14: #{attention_forward.1} parent=1 // pred_check
      _
    $region15: #{attention_forward.1} parent=1 // pred_check_branch
      %30 = sbr.rel (0) target = $region17
    $region16: #{attention_forward.1} parent=1 // pred_region
      %31 = dma.done [#allocation3], 256
    $region17: #{attention_forward.1} parent=1 // pred_fallthru
      _
    %v32 = vld [vmem:[#allocation2] sm:$0xff]
    %v33 = vld [vmem:[#allocation2 + $0x8] sm:$0xff]
    %v34 = vld [vmem:[%s1] sm:$0x1]
    %v35 = vld [vmem:[%s2] sm:$0x3]
    %v37 = vlaneseq
    %v38 = vshrl.u32 %v37, 7
    %v39 = vsub.s32 0, %v38
    %v40 = vrot.slane %v34, %v39
    %v42 = vmul.f32 %v32, %v40
    %v43 = vmul.f32 %v33, %v40
    %vm44 = vcmask 261120
    %v45 = vsel %vm44, %v42, 0.0
    %46 = vadd.xlane.f32.xlu0 %v45
    %v47 = vpop.xlane.xlu0 %46
    %v48 = vsel %vm44, %v43, 0.0
    %49 = vadd.xlane.f32.xlu0 %v48
    %v50 = vpop.xlane.xlu0 %49
    %v51 = vmax.f32 %v47, 0.0
    %v52 = vmax.f32 %v50, 0.0
    %v53 = vrot.slane %v51, 4
    %v54 = vmax.f32 %v51, %v53
    %v55 = vrot.slane %v54, 2
    %v56 = vmax.f32 %v54, %v55
    %v57 = vrot.slane %v56, 1
    %v58 = vmax.f32 %v56, %v57
    %v59 = vrot.slane %v52, 4
    %v60 = vmax.f32 %v52, %v59
    %v61 = vrot.slane %v60, 2
    %v62 = vmax.f32 %v60, %v61
    %v63 = vrot.slane %v62, 1
    %v64 = vmax.f32 %v62, %v63
    %v65 = vsub.f32 %v51, %v58
    %v66 = vsub.f32 %v52, %v64
    %v67 = vmul.f32 %v65, 1.442695
    %v68 = vpow.pop %v67
    %v69 = vmul.f32 %v66, 1.442695
    %v70 = vpow.pop %v69
    %v71 = vlaneseq
    %v72 = vshrl.u32 %v71, 7
    %v74 = vunpack.c.l.s4 1966171168
    %v75 = vunpack.c.0.s8 %v74
    %v76 = vlaneseq
    %v77 = vshrl.u32 %v76, 7
    %v78 = vsub.s32 %v75, %v77
    %v79 = vrot.slane %v35, %v78
    %v80 = vcombine.high %v79, %v79
    %v82 = vunpack.c.l.s4 1966171168
    %v83 = vunpack.c.0.s8 %v82
    %v84 = vlaneseq
    %v85 = vshrl.u32 %v84, 7
    %v86 = vsub.s32 %v83, %v85
    %v87 = vrot.slane %v79, %v86
    %v89 = vunpack.c.l.s4 1966171168
    %v90 = vunpack.c.0.s8 %v89
    %v91 = vlaneseq
    %v92 = vshrl.u32 %v91, 7
    %v93 = vsub.s32 %v90, %v92
    %v94 = vrot.slane %v80, %v93
    %v95 = vlaneseq
    %v96 = vshrl.u32 %v95, 7
    %v97 = vsub.s32 0, %v96
    %v98 = vrot.slane %v87, %v97
    %v99 = vlaneseq
    %v100 = vshrl.u32 %v99, 7
    %v101 = vsub.s32 0, %v100
    %v102 = vrot.slane %v94, %v101
    %vm103 = vcmp.lt.s32.totalorder %v72, %v98
    %vm104 = vcmp.lt.s32.totalorder %v72, %v102
    %v105 = vsel %vm103, %v68, 0.0
    %v106 = vsel %vm104, %v70, 0.0
    %vm107 = vcmask 7168
    %v108 = vsel %vm107, %v105, 0.0
    %v109 = vrot.slane %v108, 4
    %v110 = vadd.f32 %v108, %v109
    %v111 = vrot.slane %v110, 2
    %v112 = vadd.f32 %v110, %v111
    %v113 = vrot.slane %v112, 1
    %v114 = vadd.f32 %v112, %v113
    %v115 = vsel %vm107, %v106, 0.0
    %v116 = vrot.slane %v115, 4
    %v117 = vadd.f32 %v115, %v116
    %v118 = vrot.slane %v117, 2
    %v119 = vadd.f32 %v117, %v118
    %v120 = vrot.slane %v119, 1
    %v121 = vadd.f32 %v119, %v120
    %v122 = vrcp.pop %v114
    %v123 = vrcp.pop %v121
    %v124 = vmul.f32 %v105, %v122
    %v125 = vmul.f32 %v106, %v123
    %127 = vset.pattern.permute.xlu0 0
    %128 = vperm.xlu0 %127, %v124
    %v129 = vpop.permute.xlu0 %128
    %132 = vset.pattern.permute.xlu0 0
    %133 = vperm.xlu0 %132, %v125
    %v134 = vpop.permute.xlu0 %133
    %v136 = vmul.f32 %v32, %v129
    %v137 = vmul.f32 %v33, %v134
    %v138 = vsel %vm44, %v136, 0.0
    %v139 = vrot.slane %v138, 4
    %v140 = vadd.f32 %v138, %v139
    %v141 = vrot.slane %v140, 2
    %v142 = vadd.f32 %v140, %v141
    %v143 = vrot.slane %v142, 1
    %v144 = vadd.f32 %v142, %v143
    %v145 = vsel %vm44, %v137, 0.0
    %v146 = vrot.slane %v145, 4
    %v147 = vadd.f32 %v145, %v146
    %v148 = vrot.slane %v147, 2
    %v149 = vadd.f32 %v147, %v148
    %v150 = vrot.slane %v149, 1
    %v151 = vadd.f32 %v149, %v150
    %vm154 = vcmask 1041409
    %v155 = vsel %vm154, %v151, %v144
    %vm157 = vcmask 254976
    %158 = vst.msk [vmem:[#allocation5] sm:$0x3] %vm157, %v155
    %v159 = vlaneseq
    %v160 = vand.u32 %v159, 127
    %v161 = vlaneseq
    %v162 = vshrl.u32 %v161, 7
    %v163 = vsub.s32 %v160, %v162
    %v164 = vrot.slane %v129, %v163
    %v165 = vlaneseq
    %v166 = vshrl.u32 %v165, 7
    %v167 = vsub.s32 %v160, %v166
    %v168 = vrot.slane %v134, %v167
    %v169 = vsel %vm154, %v168, %v164
    %vm171 = vcmask 58368
    %172 = vst.msk [vmem:[#allocation6] sm:$0x3] %vm171, %v169
    // Predicated region
    $region18: #{attention_forward.1} parent=1 // pred_check
      _
    $region19: #{attention_forward.1} parent=1 // pred_check_branch
      %174 = sbr.rel (0) target = $region21
    $region20: #{attention_forward.1} parent=1 // pred_region
      %s176 = ssub.s32 32, 32
      %177 = vsyncadd [#allocation4], %s176
      %s179 = sshll.u32 [#allocation5], 4
      %s180 = int_to_ptr.vmem [resolvable:$true] %s179
      %182 = dma.vmem_to_hbm [thread:$0]  %s180, 32, %s3, [#allocation4]
    $region21: #{attention_forward.1} parent=1 // pred_fallthru
      _
    // Predicated region
    $region22: #{attention_forward.1} parent=1 // pred_check
      _
    $region23: #{attention_forward.1} parent=1 // pred_check_branch
      %184 = sbr.rel (0) target = $region25
    $region24: #{attention_forward.1} parent=1 // pred_region
      %s186 = ssub.s32 32, 32
      %187 = vsyncadd [#allocation7], %s186
      %s189 = sshll.u32 [#allocation6], 4
      %s190 = int_to_ptr.vmem [resolvable:$true] %s189
      %192 = dma.vmem_to_hbm [thread:$0]  %s190, 32, %s4, [#allocation7]
    $region25: #{attention_forward.1} parent=1 // pred_fallthru
      _
    // Predicated region
    $region26: #{attention_forward.1} parent=1 // pred_check
      _
    $region27: #{attention_forward.1} parent=1 // pred_check_branch
      %194 = sbr.rel (0) target = $region29
    $region28: #{attention_forward.1} parent=1 // pred_region
      %195 = dma.done [#allocation4], 32
    $region29: #{attention_forward.1} parent=1 // pred_fallthru
      _
    // Predicated region
    $region30: #{attention_forward.1} parent=1 // pred_check
      _
    $region31: #{attention_forward.1} parent=1 // pred_check_branch
      %197 = sbr.rel (0) target = $region33
    $region32: #{attention_forward.1} parent=1 // pred_region
      %198 = dma.done [#allocation7], 32
    $region33: #{attention_forward.1} parent=1 // pred_fallthru
      _
    %199 = vsyncpa [#allocation3], 1
    %200 = vsyncpa [#allocation4], 1
    %201 = vsyncpa [#allocation7], 1

</llo_original>
